<compile_context>
chip_gen: v6e
topology: v6e:2x2x1
jax: 0.10.0
libtpu: 0.0.40
codegen_flags: <defaults>
</compile_context>

<pallas_src>
import functools

import jax
import jax.numpy as jnp
from jax.experimental import pallas as pl
from jax.experimental.pallas import tpu as pltpu

# ----------------------------- hyperparameters ------------------------------
EMBED_DIM = 768            # fixed by the module (reshape(..., 768) in forward)
CLASS_NUM = 1
KERNEL_NUM = 10            # Co
KERNEL_SIZES = (3, 4, 5)   # Co * len(kernel_sizes) must equal 30 (fc2 in-features)
CO = KERNEL_NUM
FEAT = CO * len(KERNEL_SIZES)       # 30
WCOLS = sum(KERNEL_SIZES) * CO      # 120: concatenated (f, j) weight slices
PAD = 2                             # Conv2d padding=(2, 0) on the sequence axis

# Kept f32 so the check against the f32 reference is tight. On v5e/v6e, setting
# this to jnp.bfloat16 (and passing bf16 activations) halves HBM/VMEM traffic of
# the memory-bound activation stream at a small accuracy cost.
MXU_DTYPE = jnp.float32


# --------------------------- fused forward kernel ---------------------------
def _conv_relu_maxpool(x2d, wcat, bcat, batch, seqlen):
    """x2d: (batch*seqlen, D) activation block; wcat: (D, 120); bcat: (1, 30).

    Returns (batch, 30): for each f in (3,4,5), max_t ReLU(conv_f(x)[t] + b_f),
    channel-concatenated (identical to TextCNN_2.predict without dropout).
    """
    # One lane-dense MXU matmul for the whole batch block: every (f, j) weight
    # slice is a column group of wcat, so x streams through the MXU exactly once.
    y = jnp.dot(x2d.astype(MXU_DTYPE), wcat.astype(MXU_DTYPE),
                preferred_element_type=jnp.float32)            # (batch*seqlen, 120)

    lpad = seqlen + 2 * PAD
    zpad = jnp.zeros((PAD, WCOLS), jnp.float32)                # padding=(2,0) rows
    rows = []
    for b in range(batch):                       # static unroll over rows in block
        yb = y[b * seqlen:(b + 1) * seqlen, :]                 # (seqlen, 120)
        ypad = jnp.concatenate([zpad, yb, zpad], axis=0)       # (lpad, 120)
        groups = []
        col = 0
        for f in KERNEL_SIZES:
            lout = lpad - f + 1
            acc = ypad[0:lout, col:col + CO]
            for j in range(1, f):                # shift-and-add replaces f matmuls
                acc = acc + ypad[j:j + lout, col + j * CO:col + (j + 1) * CO]
            groups.append(jnp.max(acc, axis=0, keepdims=True))  # (1, CO) max-pool
            col += f * CO
        rows.append(jnp.concatenate(groups, axis=1))            # (1, 30)
    pooled = jnp.concatenate(rows, axis=0)                      # (batch, 30)
    # bias + ReLU commute with the max (ReLU(.+b) is monotone): apply once here.
    return jnp.maximum(pooled + bcat, 0.0)


def _forward_kernel(hs_ref, emb_ref, wcat_ref, bcat_ref, w2_ref, b2_ref, lab_ref,
                    bce_ref, *, batch, seq_len, ident_len):
    """Fused: predict(hidden) , predict(embeddings) , mul , fc2 , sigmoid , BCE."""
    wcat = wcat_ref[...]
    bcat = bcat_ref[...]
    seq_feat = _conv_relu_maxpool(hs_ref[...], wcat, bcat, batch, seq_len)     # (Bb,30)
    ident_feat = _conv_relu_maxpool(emb_ref[...], wcat, bcat, batch, ident_len)
    prod = seq_feat * ident_feat                                               # torch.mul
    logits = jnp.dot(prod, w2_ref[...],
                     preferred_element_type=jnp.float32) + b2_ref[...]         # fc2
    p = jax.nn.sigmoid(logits)
    y = lab_ref[...]
    # torch.nn.BCELoss clamps each log term at -100
    logp = jnp.maximum(jnp.log(p), -100.0)
    log1mp = jnp.maximum(jnp.log(1.0 - p), -100.0)
    bce_ref[...] = -(y * logp + (1.0 - y) * log1mp)            # per-element BCE


# ------------------------------ host wrappers --------------------------------
def _pack_conv_params(conv_params):
    """(f, D, Co) conv weights -> lane-dense (D, sum_f f*Co); biases -> (1, 30)."""
    wcols, biases = [], []
    for (w, b) in conv_params:                   # w: (f, D, Co), b: (1, Co)
        f, d, co = w.shape
        wcols.append(jnp.transpose(w, (1, 0, 2)).reshape(d, f * co))  # j-major, c-minor
        biases.append(b.reshape(1, co))
    return jnp.concatenate(wcols, axis=1), jnp.concatenate(biases, axis=1)


def textcnn2_forward(hidden_states, embeddings, m_label, params):
    """hidden_states (B, L, 768), embeddings (B, L2, 768), m_label (B, class_num)."""
    conv_params, (w2, b2) = params
    wcat, bcat = _pack_conv_params(conv_params)

    B, L, D = hidden_states.shape
    _, L2, _ = embeddings.shape
    C = m_label.shape[-1]
    m_label = m_label.reshape(B, C)

    # Up to 8 batch rows per grid step (sublane aligned); pad batch if needed.
    Bb = B if B <= 8 else 8
    nb = pl.cdiv(B, Bb)
    Bp = nb * Bb
    if Bp != B:
        hidden_states = jnp.pad(hidden_states, ((0, Bp - B), (0, 0), (0, 0)))
        embeddings = jnp.pad(embeddings, ((0, Bp - B), (0, 0), (0, 0)))
        m_label = jnp.pad(m_label, ((0, Bp - B), (0, 0)))

    # Row-major flatten is free; the kernel then issues ONE MXU matmul per input.
    hs2d = hidden_states.reshape(Bp * L, D)
    emb2d = embeddings.reshape(Bp * L2, D)

    kernel = functools.partial(_forward_kernel, batch=Bb, seq_len=L, ident_len=L2)
    bce = pl.pallas_call(
        kernel,
        out_shape=jax.ShapeDtypeStruct((Bp, C), jnp.float32),
        grid=(nb,),
        in_specs=[
            pl.BlockSpec((Bb * L, D), lambda b: (b, 0)),        # hidden_states rows
            pl.BlockSpec((Bb * L2, D), lambda b: (b, 0)),       # embeddings rows
            pl.BlockSpec((D, WCOLS), lambda b: (0, 0)),         # concatenated conv W
            pl.BlockSpec((1, FEAT), lambda b: (0, 0)),          # concatenated conv bias
            pl.BlockSpec((FEAT, C), lambda b: (0, 0)),          # fc2 weight
            pl.BlockSpec((1, C), lambda b: (0, 0)),             # fc2 bias
            pl.BlockSpec((Bb, C), lambda b: (b, 0)),            # labels
        ],
        out_specs=pl.BlockSpec((Bb, C), lambda b: (b, 0)),
        compiler_params=pltpu.CompilerParams(dimension_semantics=("parallel",)),
    )(hs2d, emb2d, wcat, bcat, w2, b2, m_label)

    # nn.BCELoss(reduction='mean') over the flattened (B*C,) probabilities.
    return jnp.mean(bce[:B])


# ------------------------------ JAX reference -------------------------------
def _predict_ref(x, conv_params):
    xpad = jnp.pad(x, ((0, 0), (PAD, PAD), (0, 0)))
    outs = []
    for f, (w, bias) in zip(KERNEL_SIZES, conv_params):
        lout = xpad.shape[1] - f + 1
        acc = jnp.zeros((x.shape[0], lout, CO), jnp.float32)
        for j in range(f):
            acc = acc + jnp.einsum("btd,dc->btc", xpad[:, j:j + lout, :], w[j],
                                   precision=jax.lax.Precision.HIGHEST)
        acc = jnp.maximum(acc + bias, 0.0)       # ReLU(conv + b), then pool (PyTorch order)
        outs.append(jnp.max(acc, axis=1))
    return jnp.concatenate(outs, axis=1)


def _forward_ref(hidden_states, embeddings, m_label, params):
    conv_params, (w2, b2) = params
    seq = _predict_ref(hidden_states, conv_params)
    ident = _predict_ref(embeddings, conv_params)
    logits = jnp.dot(seq * ident, w2, precision=jax.lax.Precision.HIGHEST) + b2
    p = jax.nn.sigmoid(logits)
    y = m_label
    bce = -(y * jnp.maximum(jnp.log(p), -100.0)
            + (1.0 - y) * jnp.maximum(jnp.log(1.0 - p), -100.0))
    return jnp.mean(bce)


# --------------------------------- main --------------------------------------
if __name__ == "__main__":
    key = jax.random.PRNGKey(0)
    kc, kw, kx, ke, kl = jax.random.split(key, 5)

    # deterministic parameter init (shapes from the module __init__)
    conv_params = []
    wkeys = jax.random.split(kc, 2 * len(KERNEL_SIZES))
    for i, f in enumerate(KERNEL_SIZES):
        w = 0.05 * jax.random.normal(wkeys[2 * i], (f, EMBED_DIM, CO), jnp.float32)
        b = 0.05 * jax.random.normal(wkeys[2 * i + 1], (1, CO), jnp.float32)
        conv_params.append((w, b))
    w2 = 0.1 * jax.random.normal(kw, (FEAT, CLASS_NUM), jnp.float32)   # fc2: Linear(30, C)
    b2 = 0.1 * jax.random.normal(jax.random.fold_in(kw, 1), (1, CLASS_NUM), jnp.float32)
    params = (conv_params, (w2, b2))

    # small deterministic inputs
    B, L, L2 = 2, 8, 6
    hidden_states = jax.random.normal(kx, (B, L, EMBED_DIM), jnp.float32)
    embeddings = jax.random.normal(ke, (B, L2, EMBED_DIM), jnp.float32)
    m_label = (jax.random.uniform(kl, (B, CLASS_NUM)) > 0.5).astype(jnp.float32)

    loss = jax.block_until_ready(
        textcnn2_forward(hidden_states, embeddings, m_label, params))
    ref = jax.block_until_ready(
        _forward_ref(hidden_states, embeddings, m_label, params))

    assert jnp.allclose(loss, ref, rtol=1e-4, atol=1e-4), (loss, ref)
    print("KERNEL_OK")
</pallas_src>

<mosaic_0001>
module attributes {stable_mosaic.version = 11 : i64} {
  func.func @_forward_kernel(%arg0: i32, %arg1: memref<16x768xf32, #tpu.memory_space<vmem>>, %arg2: memref<12x768xf32, #tpu.memory_space<vmem>>, %arg3: memref<768x120xf32, #tpu.memory_space<vmem>>, %arg4: memref<1x30xf32, #tpu.memory_space<vmem>>, %arg5: memref<30x1xf32, #tpu.memory_space<vmem>>, %arg6: memref<1x1xf32, #tpu.memory_space<vmem>>, %arg7: memref<2x1xf32, #tpu.memory_space<vmem>>, %arg8: memref<2x1xf32, #tpu.memory_space<vmem>>) attributes {dimension_semantics = [#tpu.dimension_semantics<parallel>], iteration_bounds = array<i64: 1>, scalar_prefetch = 0 : i64, scratch_operands = 0 : i64, tpu.core_type = #tpu.core_type<tc>, window_params = [{transform_indices = @transform_0, window_bounds = array<i64: 16, 768>}, {transform_indices = @transform_1, window_bounds = array<i64: 12, 768>}, {pipeline_mode = #tpu.pipeline_mode<synchronous>, transform_indices = @transform_2, window_bounds = array<i64: 768, 120>}, {pipeline_mode = #tpu.pipeline_mode<synchronous>, transform_indices = @transform_3, window_bounds = array<i64: 1, 30>}, {pipeline_mode = #tpu.pipeline_mode<synchronous>, transform_indices = @transform_4, window_bounds = array<i64: 30, 1>}, {pipeline_mode = #tpu.pipeline_mode<synchronous>, transform_indices = @transform_5, window_bounds = array<i64: 1, 1>}, {transform_indices = @transform_6, window_bounds = array<i64: 2, 1>}, {transform_indices = @transform_7, window_bounds = array<i64: 2, 1>}]} {
    %c0 = arith.constant 0 : index
    %c0_0 = arith.constant 0 : index
    %0 = vector.load %arg3[%c0, %c0_0] : memref<768x120xf32, #tpu.memory_space<vmem>>, vector<768x120xf32>
    %c0_1 = arith.constant 0 : index
    %c0_2 = arith.constant 0 : index
    %1 = vector.load %arg4[%c0_1, %c0_2] : memref<1x30xf32, #tpu.memory_space<vmem>>, vector<1x30xf32>
    %c0_3 = arith.constant 0 : index
    %c0_4 = arith.constant 0 : index
    %2 = vector.load %arg1[%c0_3, %c0_4] : memref<16x768xf32, #tpu.memory_space<vmem>>, vector<16x768xf32>
    %cst = arith.constant dense<0.000000e+00> : vector<16x120xf32>
    %3 = tpu.matmul %2, %0, %cst {dimension_numbers = #tpu.dot_dimension_numbers<[1], [0], [0], [1], [0, 0, 1, 1], [], []>} : vector<16x768xf32>, vector<768x120xf32>, vector<16x120xf32> -> vector<16x120xf32>
    %cst_5 = arith.constant 0.000000e+00 : f32
    %4 = vector.broadcast %cst_5 : f32 to vector<2x120xf32>
    %5 = vector.extract_strided_slice %3 {offsets = [0, 0], sizes = [8, 120], strides = [1, 1]} : vector<16x120xf32> to vector<8x120xf32>
    %6 = tpu.concatenate %4, %5, %4 in 0 : vector<2x120xf32>, vector<8x120xf32>, vector<2x120xf32> -> vector<12x120xf32>
    %7 = vector.extract_strided_slice %6 {offsets = [0, 0], sizes = [10, 10], strides = [1, 1]} : vector<12x120xf32> to vector<10x10xf32>
    %8 = vector.extract_strided_slice %6 {offsets = [1, 10], sizes = [10, 10], strides = [1, 1]} : vector<12x120xf32> to vector<10x10xf32>
    %9 = arith.addf %7, %8 : vector<10x10xf32>
    %10 = vector.extract_strided_slice %6 {offsets = [2, 20], sizes = [10, 10], strides = [1, 1]} : vector<12x120xf32> to vector<10x10xf32>
    %11 = arith.addf %9, %10 : vector<10x10xf32>
    %cst_6 = arith.constant dense<0xFF800000> : vector<10xf32>
    %12 = vector.multi_reduction <maximumf>, %11, %cst_6 [0] : vector<10x10xf32> to vector<10xf32>
    %13 = vector.shape_cast %12 : vector<10xf32> to vector<1x10xf32>
    %14 = vector.extract_strided_slice %6 {offsets = [0, 30], sizes = [9, 10], strides = [1, 1]} : vector<12x120xf32> to vector<9x10xf32>
    %15 = vector.extract_strided_slice %6 {offsets = [1, 40], sizes = [9, 10], strides = [1, 1]} : vector<12x120xf32> to vector<9x10xf32>
    %16 = arith.addf %14, %15 : vector<9x10xf32>
    %17 = vector.extract_strided_slice %6 {offsets = [2, 50], sizes = [9, 10], strides = [1, 1]} : vector<12x120xf32> to vector<9x10xf32>
    %18 = arith.addf %16, %17 : vector<9x10xf32>
    %19 = vector.extract_strided_slice %6 {offsets = [3, 60], sizes = [9, 10], strides = [1, 1]} : vector<12x120xf32> to vector<9x10xf32>
    %20 = arith.addf %18, %19 : vector<9x10xf32>
    %cst_7 = arith.constant dense<0xFF800000> : vector<10xf32>
    %21 = vector.multi_reduction <maximumf>, %20, %cst_7 [0] : vector<9x10xf32> to vector<10xf32>
    %22 = vector.shape_cast %21 : vector<10xf32> to vector<1x10xf32>
    %23 = vector.extract_strided_slice %6 {offsets = [0, 70], sizes = [8, 10], strides = [1, 1]} : vector<12x120xf32> to vector<8x10xf32>
    %24 = vector.extract_strided_slice %6 {offsets = [1, 80], sizes = [8, 10], strides = [1, 1]} : vector<12x120xf32> to vector<8x10xf32>
    %25 = arith.addf %23, %24 : vector<8x10xf32>
    %26 = vector.extract_strided_slice %6 {offsets = [2, 90], sizes = [8, 10], strides = [1, 1]} : vector<12x120xf32> to vector<8x10xf32>
    %27 = arith.addf %25, %26 : vector<8x10xf32>
    %28 = vector.extract_strided_slice %6 {offsets = [3, 100], sizes = [8, 10], strides = [1, 1]} : vector<12x120xf32> to vector<8x10xf32>
    %29 = arith.addf %27, %28 : vector<8x10xf32>
    %30 = vector.extract_strided_slice %6 {offsets = [4, 110], sizes = [8, 10], strides = [1, 1]} : vector<12x120xf32> to vector<8x10xf32>
    %31 = arith.addf %29, %30 : vector<8x10xf32>
    %cst_8 = arith.constant dense<0xFF800000> : vector<10xf32>
    %32 = vector.multi_reduction <maximumf>, %31, %cst_8 [0] : vector<8x10xf32> to vector<10xf32>
    %33 = vector.shape_cast %32 : vector<10xf32> to vector<1x10xf32>
    %34 = tpu.concatenate %13, %22, %33 in 1 : vector<1x10xf32>, vector<1x10xf32>, vector<1x10xf32> -> vector<1x30xf32>
    %35 = vector.extract_strided_slice %3 {offsets = [8, 0], sizes = [8, 120], strides = [1, 1]} : vector<16x120xf32> to vector<8x120xf32>
    %36 = tpu.concatenate %4, %35, %4 in 0 : vector<2x120xf32>, vector<8x120xf32>, vector<2x120xf32> -> vector<12x120xf32>
    %37 = vector.extract_strided_slice %36 {offsets = [0, 0], sizes = [10, 10], strides = [1, 1]} : vector<12x120xf32> to vector<10x10xf32>
    %38 = vector.extract_strided_slice %36 {offsets = [1, 10], sizes = [10, 10], strides = [1, 1]} : vector<12x120xf32> to vector<10x10xf32>
    %39 = arith.addf %37, %38 : vector<10x10xf32>
    %40 = vector.extract_strided_slice %36 {offsets = [2, 20], sizes = [10, 10], strides = [1, 1]} : vector<12x120xf32> to vector<10x10xf32>
    %41 = arith.addf %39, %40 : vector<10x10xf32>
    %cst_9 = arith.constant dense<0xFF800000> : vector<10xf32>
    %42 = vector.multi_reduction <maximumf>, %41, %cst_9 [0] : vector<10x10xf32> to vector<10xf32>
    %43 = vector.shape_cast %42 : vector<10xf32> to vector<1x10xf32>
    %44 = vector.extract_strided_slice %36 {offsets = [0, 30], sizes = [9, 10], strides = [1, 1]} : vector<12x120xf32> to vector<9x10xf32>
    %45 = vector.extract_strided_slice %36 {offsets = [1, 40], sizes = [9, 10], strides = [1, 1]} : vector<12x120xf32> to vector<9x10xf32>
    %46 = arith.addf %44, %45 : vector<9x10xf32>
    %47 = vector.extract_strided_slice %36 {offsets = [2, 50], sizes = [9, 10], strides = [1, 1]} : vector<12x120xf32> to vector<9x10xf32>
    %48 = arith.addf %46, %47 : vector<9x10xf32>
    %49 = vector.extract_strided_slice %36 {offsets = [3, 60], sizes = [9, 10], strides = [1, 1]} : vector<12x120xf32> to vector<9x10xf32>
    %50 = arith.addf %48, %49 : vector<9x10xf32>
    %cst_10 = arith.constant dense<0xFF800000> : vector<10xf32>
    %51 = vector.multi_reduction <maximumf>, %50, %cst_10 [0] : vector<9x10xf32> to vector<10xf32>
    %52 = vector.shape_cast %51 : vector<10xf32> to vector<1x10xf32>
    %53 = vector.extract_strided_slice %36 {offsets = [0, 70], sizes = [8, 10], strides = [1, 1]} : vector<12x120xf32> to vector<8x10xf32>
    %54 = vector.extract_strided_slice %36 {offsets = [1, 80], sizes = [8, 10], strides = [1, 1]} : vector<12x120xf32> to vector<8x10xf32>
    %55 = arith.addf %53, %54 : vector<8x10xf32>
    %56 = vector.extract_strided_slice %36 {offsets = [2, 90], sizes = [8, 10], strides = [1, 1]} : vector<12x120xf32> to vector<8x10xf32>
    %57 = arith.addf %55, %56 : vector<8x10xf32>
    %58 = vector.extract_strided_slice %36 {offsets = [3, 100], sizes = [8, 10], strides = [1, 1]} : vector<12x120xf32> to vector<8x10xf32>
    %59 = arith.addf %57, %58 : vector<8x10xf32>
    %60 = vector.extract_strided_slice %36 {offsets = [4, 110], sizes = [8, 10], strides = [1, 1]} : vector<12x120xf32> to vector<8x10xf32>
    %61 = arith.addf %59, %60 : vector<8x10xf32>
    %cst_11 = arith.constant dense<0xFF800000> : vector<10xf32>
    %62 = vector.multi_reduction <maximumf>, %61, %cst_11 [0] : vector<8x10xf32> to vector<10xf32>
    %63 = vector.shape_cast %62 : vector<10xf32> to vector<1x10xf32>
    %64 = tpu.concatenate %43, %52, %63 in 1 : vector<1x10xf32>, vector<1x10xf32>, vector<1x10xf32> -> vector<1x30xf32>
    %65 = tpu.concatenate %34, %64 in 0 : vector<1x30xf32>, vector<1x30xf32> -> vector<2x30xf32>
    %66 = vector.broadcast %1 : vector<1x30xf32> to vector<2x30xf32>
    %67 = arith.addf %65, %66 : vector<2x30xf32>
    %cst_12 = arith.constant 0.000000e+00 : f32
    %68 = vector.broadcast %cst_12 : f32 to vector<2x30xf32>
    %69 = arith.maximumf %67, %68 : vector<2x30xf32>
    %c0_13 = arith.constant 0 : index
    %c0_14 = arith.constant 0 : index
    %70 = vector.load %arg2[%c0_13, %c0_14] : memref<12x768xf32, #tpu.memory_space<vmem>>, vector<12x768xf32>
    %cst_15 = arith.constant dense<0.000000e+00> : vector<12x120xf32>
    %71 = tpu.matmul %70, %0, %cst_15 {dimension_numbers = #tpu.dot_dimension_numbers<[1], [0], [0], [1], [0, 0, 1, 1], [], []>} : vector<12x768xf32>, vector<768x120xf32>, vector<12x120xf32> -> vector<12x120xf32>
    %cst_16 = arith.constant 0.000000e+00 : f32
    %72 = vector.broadcast %cst_16 : f32 to vector<2x120xf32>
    %73 = vector.extract_strided_slice %71 {offsets = [0, 0], sizes = [6, 120], strides = [1, 1]} : vector<12x120xf32> to vector<6x120xf32>
    %74 = tpu.concatenate %72, %73, %72 in 0 : vector<2x120xf32>, vector<6x120xf32>, vector<2x120xf32> -> vector<10x120xf32>
    %75 = vector.extract_strided_slice %74 {offsets = [0, 0], sizes = [8, 10], strides = [1, 1]} : vector<10x120xf32> to vector<8x10xf32>
    %76 = vector.extract_strided_slice %74 {offsets = [1, 10], sizes = [8, 10], strides = [1, 1]} : vector<10x120xf32> to vector<8x10xf32>
    %77 = arith.addf %75, %76 : vector<8x10xf32>
    %78 = vector.extract_strided_slice %74 {offsets = [2, 20], sizes = [8, 10], strides = [1, 1]} : vector<10x120xf32> to vector<8x10xf32>
    %79 = arith.addf %77, %78 : vector<8x10xf32>
    %cst_17 = arith.constant dense<0xFF800000> : vector<10xf32>
    %80 = vector.multi_reduction <maximumf>, %79, %cst_17 [0] : vector<8x10xf32> to vector<10xf32>
    %81 = vector.shape_cast %80 : vector<10xf32> to vector<1x10xf32>
    %82 = vector.extract_strided_slice %74 {offsets = [0, 30], sizes = [7, 10], strides = [1, 1]} : vector<10x120xf32> to vector<7x10xf32>
    %83 = vector.extract_strided_slice %74 {offsets = [1, 40], sizes = [7, 10], strides = [1, 1]} : vector<10x120xf32> to vector<7x10xf32>
    %84 = arith.addf %82, %83 : vector<7x10xf32>
    %85 = vector.extract_strided_slice %74 {offsets = [2, 50], sizes = [7, 10], strides = [1, 1]} : vector<10x120xf32> to vector<7x10xf32>
    %86 = arith.addf %84, %85 : vector<7x10xf32>
    %87 = vector.extract_strided_slice %74 {offsets = [3, 60], sizes = [7, 10], strides = [1, 1]} : vector<10x120xf32> to vector<7x10xf32>
    %88 = arith.addf %86, %87 : vector<7x10xf32>
    %cst_18 = arith.constant dense<0xFF800000> : vector<10xf32>
    %89 = vector.multi_reduction <maximumf>, %88, %cst_18 [0] : vector<7x10xf32> to vector<10xf32>
    %90 = vector.shape_cast %89 : vector<10xf32> to vector<1x10xf32>
    %91 = vector.extract_strided_slice %74 {offsets = [0, 70], sizes = [6, 10], strides = [1, 1]} : vector<10x120xf32> to vector<6x10xf32>
    %92 = vector.extract_strided_slice %74 {offsets = [1, 80], sizes = [6, 10], strides = [1, 1]} : vector<10x120xf32> to vector<6x10xf32>
    %93 = arith.addf %91, %92 : vector<6x10xf32>
    %94 = vector.extract_strided_slice %74 {offsets = [2, 90], sizes = [6, 10], strides = [1, 1]} : vector<10x120xf32> to vector<6x10xf32>
    %95 = arith.addf %93, %94 : vector<6x10xf32>
    %96 = vector.extract_strided_slice %74 {offsets = [3, 100], sizes = [6, 10], strides = [1, 1]} : vector<10x120xf32> to vector<6x10xf32>
    %97 = arith.addf %95, %96 : vector<6x10xf32>
    %98 = vector.extract_strided_slice %74 {offsets = [4, 110], sizes = [6, 10], strides = [1, 1]} : vector<10x120xf32> to vector<6x10xf32>
    %99 = arith.addf %97, %98 : vector<6x10xf32>
    %cst_19 = arith.constant dense<0xFF800000> : vector<10xf32>
    %100 = vector.multi_reduction <maximumf>, %99, %cst_19 [0] : vector<6x10xf32> to vector<10xf32>
    %101 = vector.shape_cast %100 : vector<10xf32> to vector<1x10xf32>
    %102 = tpu.concatenate %81, %90, %101 in 1 : vector<1x10xf32>, vector<1x10xf32>, vector<1x10xf32> -> vector<1x30xf32>
    %103 = vector.extract_strided_slice %71 {offsets = [6, 0], sizes = [6, 120], strides = [1, 1]} : vector<12x120xf32> to vector<6x120xf32>
    %104 = tpu.concatenate %72, %103, %72 in 0 : vector<2x120xf32>, vector<6x120xf32>, vector<2x120xf32> -> vector<10x120xf32>
    %105 = vector.extract_strided_slice %104 {offsets = [0, 0], sizes = [8, 10], strides = [1, 1]} : vector<10x120xf32> to vector<8x10xf32>
    %106 = vector.extract_strided_slice %104 {offsets = [1, 10], sizes = [8, 10], strides = [1, 1]} : vector<10x120xf32> to vector<8x10xf32>
    %107 = arith.addf %105, %106 : vector<8x10xf32>
    %108 = vector.extract_strided_slice %104 {offsets = [2, 20], sizes = [8, 10], strides = [1, 1]} : vector<10x120xf32> to vector<8x10xf32>
    %109 = arith.addf %107, %108 : vector<8x10xf32>
    %cst_20 = arith.constant dense<0xFF800000> : vector<10xf32>
    %110 = vector.multi_reduction <maximumf>, %109, %cst_20 [0] : vector<8x10xf32> to vector<10xf32>
    %111 = vector.shape_cast %110 : vector<10xf32> to vector<1x10xf32>
    %112 = vector.extract_strided_slice %104 {offsets = [0, 30], sizes = [7, 10], strides = [1, 1]} : vector<10x120xf32> to vector<7x10xf32>
    %113 = vector.extract_strided_slice %104 {offsets = [1, 40], sizes = [7, 10], strides = [1, 1]} : vector<10x120xf32> to vector<7x10xf32>
    %114 = arith.addf %112, %113 : vector<7x10xf32>
    %115 = vector.extract_strided_slice %104 {offsets = [2, 50], sizes = [7, 10], strides = [1, 1]} : vector<10x120xf32> to vector<7x10xf32>
    %116 = arith.addf %114, %115 : vector<7x10xf32>
    %117 = vector.extract_strided_slice %104 {offsets = [3, 60], sizes = [7, 10], strides = [1, 1]} : vector<10x120xf32> to vector<7x10xf32>
    %118 = arith.addf %116, %117 : vector<7x10xf32>
    %cst_21 = arith.constant dense<0xFF800000> : vector<10xf32>
    %119 = vector.multi_reduction <maximumf>, %118, %cst_21 [0] : vector<7x10xf32> to vector<10xf32>
    %120 = vector.shape_cast %119 : vector<10xf32> to vector<1x10xf32>
    %121 = vector.extract_strided_slice %104 {offsets = [0, 70], sizes = [6, 10], strides = [1, 1]} : vector<10x120xf32> to vector<6x10xf32>
    %122 = vector.extract_strided_slice %104 {offsets = [1, 80], sizes = [6, 10], strides = [1, 1]} : vector<10x120xf32> to vector<6x10xf32>
    %123 = arith.addf %121, %122 : vector<6x10xf32>
    %124 = vector.extract_strided_slice %104 {offsets = [2, 90], sizes = [6, 10], strides = [1, 1]} : vector<10x120xf32> to vector<6x10xf32>
    %125 = arith.addf %123, %124 : vector<6x10xf32>
    %126 = vector.extract_strided_slice %104 {offsets = [3, 100], sizes = [6, 10], strides = [1, 1]} : vector<10x120xf32> to vector<6x10xf32>
    %127 = arith.addf %125, %126 : vector<6x10xf32>
    %128 = vector.extract_strided_slice %104 {offsets = [4, 110], sizes = [6, 10], strides = [1, 1]} : vector<10x120xf32> to vector<6x10xf32>
    %129 = arith.addf %127, %128 : vector<6x10xf32>
    %cst_22 = arith.constant dense<0xFF800000> : vector<10xf32>
    %130 = vector.multi_reduction <maximumf>, %129, %cst_22 [0] : vector<6x10xf32> to vector<10xf32>
    %131 = vector.shape_cast %130 : vector<10xf32> to vector<1x10xf32>
    %132 = tpu.concatenate %111, %120, %131 in 1 : vector<1x10xf32>, vector<1x10xf32>, vector<1x10xf32> -> vector<1x30xf32>
    %133 = tpu.concatenate %102, %132 in 0 : vector<1x30xf32>, vector<1x30xf32> -> vector<2x30xf32>
    %134 = vector.broadcast %1 : vector<1x30xf32> to vector<2x30xf32>
    %135 = arith.addf %133, %134 : vector<2x30xf32>
    %cst_23 = arith.constant 0.000000e+00 : f32
    %136 = vector.broadcast %cst_23 : f32 to vector<2x30xf32>
    %137 = arith.maximumf %135, %136 : vector<2x30xf32>
    %138 = arith.mulf %69, %137 : vector<2x30xf32>
    %c0_24 = arith.constant 0 : index
    %c0_25 = arith.constant 0 : index
    %139 = vector.load %arg5[%c0_24, %c0_25] : memref<30x1xf32, #tpu.memory_space<vmem>>, vector<30x1xf32>
    %cst_26 = arith.constant dense<0.000000e+00> : vector<2x1xf32>
    %140 = tpu.matmul %138, %139, %cst_26 {dimension_numbers = #tpu.dot_dimension_numbers<[1], [0], [0], [1], [0, 0, 1, 1], [], []>} : vector<2x30xf32>, vector<30x1xf32>, vector<2x1xf32> -> vector<2x1xf32>
    %c0_27 = arith.constant 0 : index
    %c0_28 = arith.constant 0 : index
    %141 = vector.load %arg6[%c0_27, %c0_28] : memref<1x1xf32, #tpu.memory_space<vmem>>, vector<1x1xf32>
    %142 = vector.broadcast %141 : vector<1x1xf32> to vector<2x1xf32>
    %143 = arith.addf %140, %142 : vector<2x1xf32>
    %144 = arith.negf %143 : vector<2x1xf32>
    %145 = math.exp %144 : vector<2x1xf32>
    %cst_29 = arith.constant 1.000000e+00 : f32
    %146 = vector.broadcast %cst_29 : f32 to vector<2x1xf32>
    %147 = arith.addf %146, %145 : vector<2x1xf32>
    %148 = arith.divf %146, %147 : vector<2x1xf32>
    %c0_30 = arith.constant 0 : index
    %c0_31 = arith.constant 0 : index
    %149 = vector.load %arg7[%c0_30, %c0_31] : memref<2x1xf32, #tpu.memory_space<vmem>>, vector<2x1xf32>
    %150 = math.log %148 : vector<2x1xf32>
    %cst_32 = arith.constant -1.000000e+02 : f32
    %151 = vector.broadcast %cst_32 : f32 to vector<2x1xf32>
    %152 = arith.maximumf %150, %151 : vector<2x1xf32>
    %cst_33 = arith.constant 1.000000e+00 : f32
    %153 = vector.broadcast %cst_33 : f32 to vector<2x1xf32>
    %154 = arith.subf %153, %148 : vector<2x1xf32>
    %155 = math.log %154 : vector<2x1xf32>
    %cst_34 = arith.constant -1.000000e+02 : f32
    %156 = vector.broadcast %cst_34 : f32 to vector<2x1xf32>
    %157 = arith.maximumf %155, %156 : vector<2x1xf32>
    %158 = arith.mulf %149, %152 : vector<2x1xf32>
    %cst_35 = arith.constant 1.000000e+00 : f32
    %159 = vector.broadcast %cst_35 : f32 to vector<2x1xf32>
    %160 = arith.subf %159, %149 : vector<2x1xf32>
    %161 = arith.mulf %160, %157 : vector<2x1xf32>
    %162 = arith.addf %158, %161 : vector<2x1xf32>
    %cst_36 = arith.constant 0.000000e+00 : f32
    %163 = vector.broadcast %cst_36 : f32 to vector<2x1xf32>
    %164 = arith.subf %163, %162 : vector<2x1xf32>
    %c0_37 = arith.constant 0 : index
    %c0_38 = arith.constant 0 : index
    %165 = vector.load %arg8[%c0_37, %c0_38] : memref<2x1xf32, #tpu.memory_space<vmem>>, vector<2x1xf32>
    tpu.vector_store %arg8[%c0_37, %c0_38], %164 {strides = array<i32>} : memref<2x1xf32, #tpu.memory_space<vmem>>, vector<2x1xf32>,
    return
  }
  func.func @transform_0(%arg0: i32) -> (i32, i32) {
    %c0_i32 = arith.constant 0 : i32
    %c0_i32_0 = arith.constant 0 : i32
    return %arg0, %c0_i32 : i32, i32
  }
  func.func @transform_1(%arg0: i32) -> (i32, i32) {
    %c0_i32 = arith.constant 0 : i32
    %c0_i32_0 = arith.constant 0 : i32
    return %arg0, %c0_i32 : i32, i32
  }
  func.func @transform_2(%arg0: i32) -> (i32, i32) {
    %c0_i32 = arith.constant 0 : i32
    %c0_i32_0 = arith.constant 0 : i32
    %c0_i32_1 = arith.constant 0 : i32
    return %c0_i32, %c0_i32_0 : i32, i32
  }
  func.func @transform_3(%arg0: i32) -> (i32, i32) {
    %c0_i32 = arith.constant 0 : i32
    %c0_i32_0 = arith.constant 0 : i32
    %c0_i32_1 = arith.constant 0 : i32
    return %c0_i32, %c0_i32_0 : i32, i32
  }
  func.func @transform_4(%arg0: i32) -> (i32, i32) {
    %c0_i32 = arith.constant 0 : i32
    %c0_i32_0 = arith.constant 0 : i32
    %c0_i32_1 = arith.constant 0 : i32
    return %c0_i32, %c0_i32_0 : i32, i32
  }
  func.func @transform_5(%arg0: i32) -> (i32, i32) {
    %c0_i32 = arith.constant 0 : i32
    %c0_i32_0 = arith.constant 0 : i32
    %c0_i32_1 = arith.constant 0 : i32
    return %c0_i32, %c0_i32_0 : i32, i32
  }
  func.func @transform_6(%arg0: i32) -> (i32, i32) {
    %c0_i32 = arith.constant 0 : i32
    %c0_i32_0 = arith.constant 0 : i32
    return %arg0, %c0_i32 : i32, i32
  }
  func.func @transform_7(%arg0: i32) -> (i32, i32) {
    %c0_i32 = arith.constant 0 : i32
    %c0_i32_0 = arith.constant 0 : i32
    return %arg0, %c0_i32 : i32, i32
  }
}

</mosaic_0001>

<llo_original>
// kernel: tpu_custom_call.1
$region0: #{tpu_custom_call.1}
  #allocation0 [shape = 'u32[]', space=smem, size = 0x4, offset = 0x4, fixed_abs, tag = 'smem constant byte address 0x4 - core index']
  #allocation1 [shape = 'u32[144,128]{1,0:T(1,128)}', space=vmem, size = 0x12000, scoped, tag = 'internal scratch']
  #allocation2 [shape = 'f32[1,1]{1,0:T(1,128)S(1)}', space=vmem, size = 0x200, scoped, tag = 'scoped memory for tpu_custom_call.1']
  %s0 = inlined_call_operand.vmem [shape: f32[16,768], index: 0, kind: input, shape index: {}]
  %s1 = inlined_call_operand.vmem [shape: f32[12,768], index: 1, kind: input, shape index: {}]
  %s2 = inlined_call_operand.vmem [shape: f32[768,120], index: 2, kind: input, shape index: {}]
  %s3 = inlined_call_operand.vmem [shape: f32[1,30], index: 3, kind: input, shape index: {}]
  %s4 = inlined_call_operand.vmem [shape: f32[30,1], index: 4, kind: input, shape index: {}]
  %s5 = inlined_call_operand.<no memory space> [shape: f32[1,1], index: 5, kind: input, shape index: {}]
  %s6 = inlined_call_operand.vmem [shape: f32[2,1], index: 6, kind: input, shape index: {}]
  %s7 = inlined_call_operand.vmem [shape: f32[2,1], index: 7, kind: output, shape index: {}]
  %s8 = sld [smem:[#allocation0]]
  $region38: #{tpu_custom_call.1} parent=0
    _
  %s10 = ssub.s32 1, %s8
  %s11 = scalar_select 0, %s10, %s8
  %v12 = vstv %s5
  %13 = vst [vmem:[#allocation2] sm:$0x1] %v12
  // Predicated region
  $region2: #{tpu_custom_call.1} parent=0 // pred_check
    _
  $region3: #{tpu_custom_call.1} parent=0 // pred_check_branch
    %15 = sbr.rel (0) target = $region5
  $region4: #{tpu_custom_call.1} parent=0 // pred_region
    _
  $region5: #{tpu_custom_call.1} parent=0 // pred_fallthru
    _
  // Predicated region
  $region6: #{tpu_custom_call.1} parent=0 // pred_check
    _
  $region7: #{tpu_custom_call.1} parent=0 // pred_check_branch
    %17 = sbr.rel (0) target = $region9
  $region8: #{tpu_custom_call.1} parent=0 // pred_region
    _
  $region9: #{tpu_custom_call.1} parent=0 // pred_fallthru
    _
  // Predicated region
  $region10: #{tpu_custom_call.1} parent=0 // pred_check
    _
  $region11: #{tpu_custom_call.1} parent=0 // pred_check_branch
    %19 = sbr.rel (0) target = $region13
  $region12: #{tpu_custom_call.1} parent=0 // pred_region
    _
  $region13: #{tpu_custom_call.1} parent=0 // pred_fallthru
    _
  // Predicated region
  $region14: #{tpu_custom_call.1} parent=0 // pred_check
    _
  $region15: #{tpu_custom_call.1} parent=0 // pred_check_branch
    %21 = sbr.rel (0) target = $region17
  $region16: #{tpu_custom_call.1} parent=0 // pred_region
    _
  $region17: #{tpu_custom_call.1} parent=0 // pred_fallthru
    _
  // Predicated region
  $region18: #{tpu_custom_call.1} parent=0 // pred_check
    _
  $region19: #{tpu_custom_call.1} parent=0 // pred_check_branch
    %23 = sbr.rel (0) target = $region21
  $region20: #{tpu_custom_call.1} parent=0 // pred_region
    _
  $region21: #{tpu_custom_call.1} parent=0 // pred_fallthru
    _
  // Predicated region
  $region22: #{tpu_custom_call.1} parent=0 // pred_check
    _
  $region23: #{tpu_custom_call.1} parent=0 // pred_check_branch
    %25 = sbr.rel (0) target = $region25
  $region24: #{tpu_custom_call.1} parent=0 // pred_region
    _
  $region25: #{tpu_custom_call.1} parent=0 // pred_fallthru
    _
  // Predicated region
  $region26: #{tpu_custom_call.1} parent=0 // pred_check
    _
  $region27: #{tpu_custom_call.1} parent=0 // pred_check_branch
    %27 = sbr.rel (0) target = $region29
  $region28: #{tpu_custom_call.1} parent=0 // pred_region
    _
  $region29: #{tpu_custom_call.1} parent=0 // pred_fallthru
    _
  %v28 = vld [vmem:[%s2] sm:$0xff]
  %v29 = vld [vmem:[%s2 + $0x8] sm:$0xff]
  %v30 = vld [vmem:[%s2 + $0x10] sm:$0xff]
  %v31 = vld [vmem:[%s2 + $0x18] sm:$0xff]
  %v32 = vld [vmem:[%s2 + $0x20] sm:$0xff]
  %v33 = vld [vmem:[%s2 + $0x28] sm:$0xff]
  %v34 = vld [vmem:[%s2 + $0x30] sm:$0xff]
  %v35 = vld [vmem:[%s2 + $0x38] sm:$0xff]
  %v36 = vld [vmem:[%s2 + $0x40] sm:$0xff]
  %v37 = vld [vmem:[%s2 + $0x48] sm:$0xff]
  %v38 = vld [vmem:[%s2 + $0x50] sm:$0xff]
  %v39 = vld [vmem:[%s2 + $0x58] sm:$0xff]
  %v40 = vld [vmem:[%s2 + $0x60] sm:$0xff]
  %v41 = vld [vmem:[%s2 + $0x68] sm:$0xff]
  %v42 = vld [vmem:[%s2 + $0x70] sm:$0xff]
  %v43 = vld [vmem:[%s2 + $0x78] sm:$0xff]
  %v44 = vld [vmem:[%s2 + $0x80] sm:$0xff]
  %v45 = vld [vmem:[%s2 + $0x88] sm:$0xff]
  %v46 = vld [vmem:[%s2 + $0x90] sm:$0xff]
  %v47 = vld [vmem:[%s2 + $0x98] sm:$0xff]
  %v48 = vld [vmem:[%s2 + $0xa0] sm:$0xff]
  %v49 = vld [vmem:[%s2 + $0xa8] sm:$0xff]
  %v50 = vld [vmem:[%s2 + $0xb0] sm:$0xff]
  %v51 = vld [vmem:[%s2 + $0xb8] sm:$0xff]
  %v52 = vld [vmem:[%s2 + $0xc0] sm:$0xff]
  %v53 = vld [vmem:[%s2 + $0xc8] sm:$0xff]
  %v54 = vld [vmem:[%s2 + $0xd0] sm:$0xff]
  %v55 = vld [vmem:[%s2 + $0xd8] sm:$0xff]
  %v56 = vld [vmem:[%s2 + $0xe0] sm:$0xff]
  %v57 = vld [vmem:[%s2 + $0xe8] sm:$0xff]
  %v58 = vld [vmem:[%s2 + $0xf0] sm:$0xff]
  %v59 = vld [vmem:[%s2 + $0xf8] sm:$0xff]
  %v60 = vld [vmem:[%s2 + $0x100] sm:$0xff]
  %v61 = vld [vmem:[%s2 + $0x108] sm:$0xff]
  %v62 = vld [vmem:[%s2 + $0x110] sm:$0xff]
  %v63 = vld [vmem:[%s2 + $0x118] sm:$0xff]
  %v64 = vld [vmem:[%s2 + $0x120] sm:$0xff]
  %v65 = vld [vmem:[%s2 + $0x128] sm:$0xff]
  %v66 = vld [vmem:[%s2 + $0x130] sm:$0xff]
  %v67 = vld [vmem:[%s2 + $0x138] sm:$0xff]
  %v68 = vld [vmem:[%s2 + $0x140] sm:$0xff]
  %v69 = vld [vmem:[%s2 + $0x148] sm:$0xff]
  %v70 = vld [vmem:[%s2 + $0x150] sm:$0xff]
  %v71 = vld [vmem:[%s2 + $0x158] sm:$0xff]
  %v72 = vld [vmem:[%s2 + $0x160] sm:$0xff]
  %v73 = vld [vmem:[%s2 + $0x168] sm:$0xff]
  %v74 = vld [vmem:[%s2 + $0x170] sm:$0xff]
  %v75 = vld [vmem:[%s2 + $0x178] sm:$0xff]
  %v76 = vld [vmem:[%s2 + $0x180] sm:$0xff]
  %v77 = vld [vmem:[%s2 + $0x188] sm:$0xff]
  %v78 = vld [vmem:[%s2 + $0x190] sm:$0xff]
  %v79 = vld [vmem:[%s2 + $0x198] sm:$0xff]
  %v80 = vld [vmem:[%s2 + $0x1a0] sm:$0xff]
  %v81 = vld [vmem:[%s2 + $0x1a8] sm:$0xff]
  %v82 = vld [vmem:[%s2 + $0x1b0] sm:$0xff]
  %v83 = vld [vmem:[%s2 + $0x1b8] sm:$0xff]
  %v84 = vld [vmem:[%s2 + $0x1c0] sm:$0xff]
  %v85 = vld [vmem:[%s2 + $0x1c8] sm:$0xff]
  %v86 = vld [vmem:[%s2 + $0x1d0] sm:$0xff]
  %v87 = vld [vmem:[%s2 + $0x1d8] sm:$0xff]
  %v88 = vld [vmem:[%s2 + $0x1e0] sm:$0xff]
  %v89 = vld [vmem:[%s2 + $0x1e8] sm:$0xff]
  %v90 = vld [vmem:[%s2 + $0x1f0] sm:$0xff]
  %v91 = vld [vmem:[%s2 + $0x1f8] sm:$0xff]
  %v92 = vld [vmem:[%s2 + $0x200] sm:$0xff]
  %v93 = vld [vmem:[%s2 + $0x208] sm:$0xff]
  %v94 = vld [vmem:[%s2 + $0x210] sm:$0xff]
  %v95 = vld [vmem:[%s2 + $0x218] sm:$0xff]
  %v96 = vld [vmem:[%s2 + $0x220] sm:$0xff]
  %v97 = vld [vmem:[%s2 + $0x228] sm:$0xff]
  %v98 = vld [vmem:[%s2 + $0x230] sm:$0xff]
  %v99 = vld [vmem:[%s2 + $0x238] sm:$0xff]
  %v100 = vld [vmem:[%s2 + $0x240] sm:$0xff]
  %v101 = vld [vmem:[%s2 + $0x248] sm:$0xff]
  %v102 = vld [vmem:[%s2 + $0x250] sm:$0xff]
  %v103 = vld [vmem:[%s2 + $0x258] sm:$0xff]
  %v104 = vld [vmem:[%s2 + $0x260] sm:$0xff]
  %v105 = vld [vmem:[%s2 + $0x268] sm:$0xff]
  %v106 = vld [vmem:[%s2 + $0x270] sm:$0xff]
  %v107 = vld [vmem:[%s2 + $0x278] sm:$0xff]
  %v108 = vld [vmem:[%s2 + $0x280] sm:$0xff]
  %v109 = vld [vmem:[%s2 + $0x288] sm:$0xff]
  %v110 = vld [vmem:[%s2 + $0x290] sm:$0xff]
  %v111 = vld [vmem:[%s2 + $0x298] sm:$0xff]
  %v112 = vld [vmem:[%s2 + $0x2a0] sm:$0xff]
  %v113 = vld [vmem:[%s2 + $0x2a8] sm:$0xff]
  %v114 = vld [vmem:[%s2 + $0x2b0] sm:$0xff]
  %v115 = vld [vmem:[%s2 + $0x2b8] sm:$0xff]
  %v116 = vld [vmem:[%s2 + $0x2c0] sm:$0xff]
  %v117 = vld [vmem:[%s2 + $0x2c8] sm:$0xff]
  %v118 = vld [vmem:[%s2 + $0x2d0] sm:$0xff]
  %v119 = vld [vmem:[%s2 + $0x2d8] sm:$0xff]
  %v120 = vld [vmem:[%s2 + $0x2e0] sm:$0xff]
  %v121 = vld [vmem:[%s2 + $0x2e8] sm:$0xff]
  %v122 = vld [vmem:[%s2 + $0x2f0] sm:$0xff]
  %v123 = vld [vmem:[%s2 + $0x2f8] sm:$0xff]
  %v124 = vld [vmem:[%s3] sm:$0x1]
  %v125 = vld [vmem:[%s0] sm:$0xff]
  %v126 = vld [vmem:[%s0 + $0x8] sm:$0xff]
  %v127 = vld [vmem:[%s0 + $0x10] sm:$0xff]
  %v128 = vld [vmem:[%s0 + $0x18] sm:$0xff]
  %v129 = vld [vmem:[%s0 + $0x20] sm:$0xff]
  %v130 = vld [vmem:[%s0 + $0x28] sm:$0xff]
  %v131 = vld [vmem:[%s0 + $0x30] sm:$0xff]
  %v132 = vld [vmem:[%s0 + $0x38] sm:$0xff]
  %v133 = vld [vmem:[%s0 + $0x40] sm:$0xff]
  %v134 = vld [vmem:[%s0 + $0x48] sm:$0xff]
  %v135 = vld [vmem:[%s0 + $0x50] sm:$0xff]
  %v136 = vld [vmem:[%s0 + $0x58] sm:$0xff]
  %137 = vmatprep.subr.mxu0 0.0
  %138 = vmatpush1.msra.mxu0 %v43
  %139 = vmatprep.subr.mxu0 0.0
  %140 = vmatpush1.msra.mxu0 %v42
  %141 = vmatprep.subr.mxu0 0.0
  %142 = vmatpush1.msra.mxu0 %v41
  %143 = vmatprep.subr.mxu0 0.0
  %144 = vmatpush1.msra.mxu0 %v40
  %145 = vmatprep.subr.mxu0 0.0
  %146 = vmatpush1.msra.mxu0 %v39
  %147 = vmatprep.subr.mxu0 0.0
  %148 = vmatpush1.msra.mxu0 %v38
  %149 = vmatprep.subr.mxu0 0.0
  %150 = vmatpush1.msra.mxu0 %v37
  %151 = vmatprep.subr.mxu0 0.0
  %152 = vmatpush1.msra.mxu0 %v36
  %153 = vmatprep.subr.mxu0 0.0
  %154 = vmatpush1.msra.mxu0 %v35
  %155 = vmatprep.subr.mxu0 0.0
  %156 = vmatpush1.msra.mxu0 %v34
  %157 = vmatprep.subr.mxu0 0.0
  %158 = vmatpush1.msra.mxu0 %v33
  %159 = vmatprep.subr.mxu0 0.0
  %160 = vmatpush1.msra.mxu0 %v32
  %161 = vmatprep.subr.mxu0 0.0
  %162 = vmatpush1.msra.mxu0 %v31
  %163 = vmatprep.subr.mxu0 0.0
  %164 = vmatpush1.msra.mxu0 %v30
  %165 = vmatprep.subr.mxu0 0.0
  %166 = vmatpush1.msra.mxu0 %v29
  %167 = vmatprep.subr.mxu0 0.0
  %168 = vmatpush1.msra.mxu0 %v28
  %169 = vmatprep.subr.mxu0 0.0
  %170 = vmatpush2.msra.mxu0 %v59
  %171 = vmatprep.subr.mxu0 0.0
  %172 = vmatpush2.msra.mxu0 %v58
  %173 = vmatprep.subr.mxu0 0.0
  %174 = vmatpush2.msra.mxu0 %v57
  %175 = vmatprep.subr.mxu0 0.0
  %176 = vmatpush2.msra.mxu0 %v56
  %177 = vmatprep.subr.mxu0 0.0
  %178 = vmatpush2.msra.mxu0 %v55
  %179 = vmatprep.subr.mxu0 0.0
  %180 = vmatpush2.msra.mxu0 %v54
  %181 = vmatprep.subr.mxu0 0.0
  %182 = vmatpush2.msra.mxu0 %v53
  %183 = vmatprep.subr.mxu0 0.0
  %184 = vmatpush2.msra.mxu0 %v52
  %185 = vmatprep.subr.mxu0 0.0
  %186 = vmatpush2.msra.mxu0 %v51
  %187 = vmatprep.subr.mxu0 0.0
  %188 = vmatpush2.msra.mxu0 %v50
  %189 = vmatprep.subr.mxu0 0.0
  %190 = vmatpush2.msra.mxu0 %v49
  %191 = vmatprep.subr.mxu0 0.0
  %192 = vmatpush2.msra.mxu0 %v48
  %193 = vmatprep.subr.mxu0 0.0
  %194 = vmatpush2.msra.mxu0 %v47
  %195 = vmatprep.subr.mxu0 0.0
  %196 = vmatpush2.msra.mxu0 %v46
  %197 = vmatprep.subr.mxu0 0.0
  %198 = vmatpush2.msra.mxu0 %v45
  %199 = vmatprep.subr.mxu0 0.0
  %200 = vmatpush2.msra.mxu0 %v44
  %201 = vmatprep.mubr.f32.mxu0 %v126
  %202 = vmatmul.mubr.f32.gmra.mxu0 %v125
  %v203 = vpop.f32.mrf.mxu0
  %v204 = vadd.f32 0.0, %v203
  %v205 = vpop.f32.mrf.mxu0
  %206 = vmatprep.mubr.f32.mxu0 %v132
  %207 = vmatmul.mubr.f32.gmra.mxu0 %v131
  %v208 = vpop.f32.mrf.mxu0
  %v209 = vadd.f32 0.0, %v208
  %v210 = vpop.f32.mrf.mxu0
  %211 = vdwg.mxu0
  %212 = vmatprep.subr.mxu0 0.0
  %213 = vmatpush1.msra.mxu0 %v75
  %214 = vmatprep.subr.mxu0 0.0
  %215 = vmatpush1.msra.mxu0 %v74
  %216 = vmatprep.subr.mxu0 0.0
  %217 = vmatpush1.msra.mxu0 %v73
  %218 = vmatprep.subr.mxu0 0.0
  %219 = vmatpush1.msra.mxu0 %v72
  %220 = vmatprep.subr.mxu0 0.0
  %221 = vmatpush1.msra.mxu0 %v71
  %222 = vmatprep.subr.mxu0 0.0
  %223 = vmatpush1.msra.mxu0 %v70
  %224 = vmatprep.subr.mxu0 0.0
  %225 = vmatpush1.msra.mxu0 %v69
  %226 = vmatprep.subr.mxu0 0.0
  %227 = vmatpush1.msra.mxu0 %v68
  %228 = vmatprep.subr.mxu0 0.0
  %229 = vmatpush1.msra.mxu0 %v67
  %230 = vmatprep.subr.mxu0 0.0
  %231 = vmatpush1.msra.mxu0 %v66
  %232 = vmatprep.subr.mxu0 0.0
  %233 = vmatpush1.msra.mxu0 %v65
  %234 = vmatprep.subr.mxu0 0.0
  %235 = vmatpush1.msra.mxu0 %v64
  %236 = vmatprep.subr.mxu0 0.0
  %237 = vmatpush1.msra.mxu0 %v63
  %238 = vmatprep.subr.mxu0 0.0
  %239 = vmatpush1.msra.mxu0 %v62
  %240 = vmatprep.subr.mxu0 0.0
  %241 = vmatpush1.msra.mxu0 %v61
  %242 = vmatprep.subr.mxu0 0.0
  %243 = vmatpush1.msra.mxu0 %v60
  %244 = vmatprep.subr.mxu0 0.0
  %245 = vmatpush2.msra.mxu0 %v91
  %246 = vmatprep.subr.mxu0 0.0
  %247 = vmatpush2.msra.mxu0 %v90
  %248 = vmatprep.subr.mxu0 0.0
  %249 = vmatpush2.msra.mxu0 %v89
  %250 = vmatprep.subr.mxu0 0.0
  %251 = vmatpush2.msra.mxu0 %v88
  %252 = vmatprep.subr.mxu0 0.0
  %253 = vmatpush2.msra.mxu0 %v87
  %254 = vmatprep.subr.mxu0 0.0
  %255 = vmatpush2.msra.mxu0 %v86
  %256 = vmatprep.subr.mxu0 0.0
  %257 = vmatpush2.msra.mxu0 %v85
  %258 = vmatprep.subr.mxu0 0.0
  %259 = vmatpush2.msra.mxu0 %v84
  %260 = vmatprep.subr.mxu0 0.0
  %261 = vmatpush2.msra.mxu0 %v83
  %262 = vmatprep.subr.mxu0 0.0
  %263 = vmatpush2.msra.mxu0 %v82
  %264 = vmatprep.subr.mxu0 0.0
  %265 = vmatpush2.msra.mxu0 %v81
  %266 = vmatprep.subr.mxu0 0.0
  %267 = vmatpush2.msra.mxu0 %v80
  %268 = vmatprep.subr.mxu0 0.0
  %269 = vmatpush2.msra.mxu0 %v79
  %270 = vmatprep.subr.mxu0 0.0
  %271 = vmatpush2.msra.mxu0 %v78
  %272 = vmatprep.subr.mxu0 0.0
  %273 = vmatpush2.msra.mxu0 %v77
  %274 = vmatprep.subr.mxu0 0.0
  %275 = vmatpush2.msra.mxu0 %v76
  %276 = vmatprep.mubr.f32.mxu0 %v128
  %277 = vmatmul.mubr.f32.gmra.mxu0 %v127
  %v278 = vpop.f32.mrf.mxu0
  %v279 = vadd.f32 %v204, %v278
  %v280 = vpop.f32.mrf.mxu0
  %281 = vmatprep.mubr.f32.mxu0 %v134
  %282 = vmatmul.mubr.f32.gmra.mxu0 %v133
  %v283 = vpop.f32.mrf.mxu0
  %v284 = vadd.f32 %v209, %v283
  %v285 = vpop.f32.mrf.mxu0
  %286 = vdwg.mxu0
  %287 = vmatprep.subr.mxu0 0.0
  %288 = vmatpush1.msra.mxu0 %v107
  %289 = vmatprep.subr.mxu0 0.0
  %290 = vmatpush1.msra.mxu0 %v106
  %291 = vmatprep.subr.mxu0 0.0
  %292 = vmatpush1.msra.mxu0 %v105
  %293 = vmatprep.subr.mxu0 0.0
  %294 = vmatpush1.msra.mxu0 %v104
  %295 = vmatprep.subr.mxu0 0.0
  %296 = vmatpush1.msra.mxu0 %v103
  %297 = vmatprep.subr.mxu0 0.0
  %298 = vmatpush1.msra.mxu0 %v102
  %299 = vmatprep.subr.mxu0 0.0
  %300 = vmatpush1.msra.mxu0 %v101
  %301 = vmatprep.subr.mxu0 0.0
  %302 = vmatpush1.msra.mxu0 %v100
  %303 = vmatprep.subr.mxu0 0.0
  %304 = vmatpush1.msra.mxu0 %v99
  %305 = vmatprep.subr.mxu0 0.0
  %306 = vmatpush1.msra.mxu0 %v98
  %307 = vmatprep.subr.mxu0 0.0
  %308 = vmatpush1.msra.mxu0 %v97
  %309 = vmatprep.subr.mxu0 0.0
  %310 = vmatpush1.msra.mxu0 %v96
  %311 = vmatprep.subr.mxu0 0.0
  %312 = vmatpush1.msra.mxu0 %v95
  %313 = vmatprep.subr.mxu0 0.0
  %314 = vmatpush1.msra.mxu0 %v94
  %315 = vmatprep.subr.mxu0 0.0
  %316 = vmatpush1.msra.mxu0 %v93
  %317 = vmatprep.subr.mxu0 0.0
  %318 = vmatpush1.msra.mxu0 %v92
  %319 = vmatprep.subr.mxu0 0.0
  %320 = vmatpush2.msra.mxu0 %v123
  %321 = vmatprep.subr.mxu0 0.0
  %322 = vmatpush2.msra.mxu0 %v122
  %323 = vmatprep.subr.mxu0 0.0
  %324 = vmatpush2.msra.mxu0 %v121
  %325 = vmatprep.subr.mxu0 0.0
  %326 = vmatpush2.msra.mxu0 %v120
  %327 = vmatprep.subr.mxu0 0.0
  %328 = vmatpush2.msra.mxu0 %v119
  %329 = vmatprep.subr.mxu0 0.0
  %330 = vmatpush2.msra.mxu0 %v118
  %331 = vmatprep.subr.mxu0 0.0
  %332 = vmatpush2.msra.mxu0 %v117
  %333 = vmatprep.subr.mxu0 0.0
  %334 = vmatpush2.msra.mxu0 %v116
  %335 = vmatprep.subr.mxu0 0.0
  %336 = vmatpush2.msra.mxu0 %v115
  %337 = vmatprep.subr.mxu0 0.0
  %338 = vmatpush2.msra.mxu0 %v114
  %339 = vmatprep.subr.mxu0 0.0
  %340 = vmatpush2.msra.mxu0 %v113
  %341 = vmatprep.subr.mxu0 0.0
  %342 = vmatpush2.msra.mxu0 %v112
  %343 = vmatprep.subr.mxu0 0.0
  %344 = vmatpush2.msra.mxu0 %v111
  %345 = vmatprep.subr.mxu0 0.0
  %346 = vmatpush2.msra.mxu0 %v110
  %347 = vmatprep.subr.mxu0 0.0
  %348 = vmatpush2.msra.mxu0 %v109
  %349 = vmatprep.subr.mxu0 0.0
  %350 = vmatpush2.msra.mxu0 %v108
  %351 = vmatprep.mubr.f32.mxu0 %v130
  %352 = vmatmul.mubr.f32.gmra.mxu0 %v129
  %v353 = vpop.f32.mrf.mxu0
  %v354 = vadd.f32 %v279, %v353
  %v355 = vpop.f32.mrf.mxu0
  %356 = vmatprep.mubr.f32.mxu0 %v136
  %357 = vmatmul.mubr.f32.gmra.mxu0 %v135
  %v358 = vpop.f32.mrf.mxu0
  %v359 = vadd.f32 %v284, %v358
  %v360 = vpop.f32.mrf.mxu0
  %361 = vdwg.mxu0
  %v363 = vrot.slane %v354, 6
  %vm365 = vcmask 1041408
  %v366 = vsel %vm365, 0.0, %v363
  %v367 = vsel %vm365, %v363, 0.0
  %vm370 = vcmask 1046528
  %v371 = vrot.slane %v366, 1
  %v372 = vrot.slane %v367, 1
  %v373 = vsel %vm370, %v371, %v372
  %374 = vrot.lane.b32.xlu0 %v373, 118
  %v375 = vpop.permute.xlu0 %374
  %376 = vrot.lane.b32.xlu0 %v372, 118
  %v377 = vpop.permute.xlu0 %376
  %v380 = vadd.f32 %v366, %v375
  %v381 = vadd.f32 %v367, %v377
  %vm382 = vcmask 1045504
  %v383 = vrot.slane %v366, 2
  %v384 = vrot.slane %v367, 2
  %v385 = vsel %vm382, %v383, %v384
  %386 = vrot.lane.b32.xlu0 %v385, 108
  %v387 = vpop.permute.xlu0 %386
  %388 = vrot.lane.b32.xlu0 %v384, 108
  %v389 = vpop.permute.xlu0 %388
  %v392 = vadd.f32 %v380, %v387
  %v393 = vadd.f32 %v381, %v389
  %vm394 = vcmask 80896
  %v395 = vsel %vm394, %v392, -inf
  %vm396 = vcmask 74752
  %v397 = vsel %vm396, %v393, -inf
  %v398 = vmax.f32 %v395, %v397
  %v399 = vrot.slane %v398, 4
  %v400 = vmax.f32 %v398, %v399
  %v401 = vrot.slane %v400, 2
  %v402 = vmax.f32 %v400, %v401
  %v403 = vrot.slane %v402, 1
  %v404 = vmax.f32 %v402, %v403
  %vm405 = vcmask 1044480
  %v406 = vrot.slane %v366, 3
  %v407 = vrot.slane %v367, 3
  %v408 = vsel %vm405, %v406, %v407
  %409 = vrot.lane.b32.xlu0 %v408, 98
  %v410 = vpop.permute.xlu0 %409
  %411 = vrot.lane.b32.xlu0 %v407, 98
  %v412 = vpop.permute.xlu0 %411
  %v415 = vadd.f32 %v392, %v410
  %v416 = vadd.f32 %v393, %v412
  %vm417 = vcmask 326896
  %v418 = vsel %vm417, %v415, -inf
  %vm419 = vcmask 319728
  %v420 = vsel %vm419, %v416, -inf
  %v421 = vmax.f32 %v418, %v420
  %v422 = vrot.slane %v421, 4
  %v423 = vmax.f32 %v421, %v422
  %v424 = vrot.slane %v423, 2
  %v425 = vmax.f32 %v423, %v424
  %v426 = vrot.slane %v425, 1
  %v427 = vmax.f32 %v425, %v426
  %vm428 = vcmask 1043456
  %v429 = vrot.slane %v366, 4
  %v430 = vrot.slane %v367, 4
  %v431 = vsel %vm428, %v429, %v430
  %432 = vrot.lane.b32.xlu0 %v431, 88
  %v433 = vpop.permute.xlu0 %432
  %v435 = vadd.f32 %v415, %v433
  %vm436 = vcmask 654896
  %v437 = vsel %vm436, %v435, -inf
  %v438 = vrot.slane %v437, 4
  %v439 = vmax.f32 %v437, %v438
  %v440 = vrot.slane %v439, 2
  %v441 = vmax.f32 %v439, %v440
  %v442 = vrot.slane %v441, 1
  %v443 = vmax.f32 %v441, %v442
  %445 = vrot.lane.b32.xlu0 %v427, 108
  %v446 = vpop.permute.xlu0 %445
  %449 = vrot.lane.b32.xlu0 %v443, 78
  %v450 = vpop.permute.xlu0 %449
  %v452 = vsel %vm394, %v404, %v446
  %vm453 = vcmask 162816
  %v454 = vsel %vm453, %v452, %v450
  %v456 = vrot.slane %v359, 6
  %v458 = vsel %vm365, 0.0, %v456
  %v459 = vsel %vm365, %v456, 0.0
  %v462 = vrot.slane %v458, 1
  %v463 = vrot.slane %v459, 1
  %v464 = vsel %vm370, %v462, %v463
  %465 = vrot.lane.b32.xlu0 %v464, 118
  %v466 = vpop.permute.xlu0 %465
  %467 = vrot.lane.b32.xlu0 %v463, 118
  %v468 = vpop.permute.xlu0 %467
  %v471 = vadd.f32 %v458, %v466
  %v472 = vadd.f32 %v459, %v468
  %v473 = vrot.slane %v458, 2
  %v474 = vrot.slane %v459, 2
  %v475 = vsel %vm382, %v473, %v474
  %476 = vrot.lane.b32.xlu0 %v475, 108
  %v477 = vpop.permute.xlu0 %476
  %478 = vrot.lane.b32.xlu0 %v474, 108
  %v479 = vpop.permute.xlu0 %478
  %v482 = vadd.f32 %v471, %v477
  %v483 = vadd.f32 %v472, %v479
  %v484 = vsel %vm394, %v482, -inf
  %v485 = vsel %vm396, %v483, -inf
  %v486 = vmax.f32 %v484, %v485
  %v487 = vrot.slane %v486, 4
  %v488 = vmax.f32 %v486, %v487
  %v489 = vrot.slane %v488, 2
  %v490 = vmax.f32 %v488, %v489
  %v491 = vrot.slane %v490, 1
  %v492 = vmax.f32 %v490, %v491
  %v493 = vrot.slane %v458, 3
  %v494 = vrot.slane %v459, 3
  %v495 = vsel %vm405, %v493, %v494
  %496 = vrot.lane.b32.xlu0 %v495, 98
  %v497 = vpop.permute.xlu0 %496
  %498 = vrot.lane.b32.xlu0 %v494, 98
  %v499 = vpop.permute.xlu0 %498
  %v502 = vadd.f32 %v482, %v497
  %v503 = vadd.f32 %v483, %v499
  %v504 = vsel %vm417, %v502, -inf
  %v505 = vsel %vm419, %v503, -inf
  %v506 = vmax.f32 %v504, %v505
  %v507 = vrot.slane %v506, 4
  %v508 = vmax.f32 %v506, %v507
  %v509 = vrot.slane %v508, 2
  %v510 = vmax.f32 %v508, %v509
  %v511 = vrot.slane %v510, 1
  %v512 = vmax.f32 %v510, %v511
  %v513 = vrot.slane %v458, 4
  %v514 = vrot.slane %v459, 4
  %v515 = vsel %vm428, %v513, %v514
  %516 = vrot.lane.b32.xlu0 %v515, 88
  %v517 = vpop.permute.xlu0 %516
  %v519 = vadd.f32 %v502, %v517
  %v520 = vsel %vm436, %v519, -inf
  %v521 = vrot.slane %v520, 4
  %v522 = vmax.f32 %v520, %v521
  %v523 = vrot.slane %v522, 2
  %v524 = vmax.f32 %v522, %v523
  %v525 = vrot.slane %v524, 1
  %v526 = vmax.f32 %v524, %v525
  %528 = vrot.lane.b32.xlu0 %v512, 108
  %v529 = vpop.permute.xlu0 %528
  %532 = vrot.lane.b32.xlu0 %v526, 78
  %v533 = vpop.permute.xlu0 %532
  %v535 = vsel %vm394, %v492, %v529
  %v536 = vsel %vm453, %v535, %v533
  %v538 = vrot.slane %v536, 7
  %vm540 = vcmask 1040384
  %v541 = vsel %vm540, %v454, %v538
  %v543 = vlaneseq
  %v544 = vshrl.u32 %v543, 7
  %v545 = vsub.s32 0, %v544
  %v546 = vrot.slane %v124, %v545
  %v548 = vadd.f32 %v541, %v546
  %v549 = vmax.f32 %v548, 0.0
  %v550 = vld [vmem:[%s1] sm:$0xff]
  %v551 = vld [vmem:[%s1 + $0x8] sm:$0xff]
  %v552 = vld [vmem:[%s1 + $0x10] sm:$0xff]
  %v553 = vld [vmem:[%s1 + $0x18] sm:$0xff]
  %v554 = vld [vmem:[%s1 + $0x20] sm:$0xff]
  %v555 = vld [vmem:[%s1 + $0x28] sm:$0xff]
  %v556 = vld [vmem:[%s1 + $0x30] sm:$0xf]
  %v557 = vld [vmem:[%s1 + $0x38] sm:$0xf]
  %v558 = vld [vmem:[%s1 + $0x40] sm:$0xf]
  %v559 = vld [vmem:[%s1 + $0x48] sm:$0xf]
  %v560 = vld [vmem:[%s1 + $0x50] sm:$0xf]
  %v561 = vld [vmem:[%s1 + $0x58] sm:$0xf]
  %562 = vmatprep.subr.mxu0 0.0
  %563 = vmatpush1.msra.mxu0 %v43
  %564 = vmatprep.subr.mxu0 0.0
  %565 = vmatpush1.msra.mxu0 %v42
  %566 = vmatprep.subr.mxu0 0.0
  %567 = vmatpush1.msra.mxu0 %v41
  %568 = vmatprep.subr.mxu0 0.0
  %569 = vmatpush1.msra.mxu0 %v40
  %570 = vmatprep.subr.mxu0 0.0
  %571 = vmatpush1.msra.mxu0 %v39
  %572 = vmatprep.subr.mxu0 0.0
  %573 = vmatpush1.msra.mxu0 %v38
  %574 = vmatprep.subr.mxu0 0.0
  %575 = vmatpush1.msra.mxu0 %v37
  %576 = vmatprep.subr.mxu0 0.0
  %577 = vmatpush1.msra.mxu0 %v36
  %578 = vmatprep.subr.mxu0 0.0
  %579 = vmatpush1.msra.mxu0 %v35
  %580 = vmatprep.subr.mxu0 0.0
  %581 = vmatpush1.msra.mxu0 %v34
  %582 = vmatprep.subr.mxu0 0.0
  %583 = vmatpush1.msra.mxu0 %v33
  %584 = vmatprep.subr.mxu0 0.0
  %585 = vmatpush1.msra.mxu0 %v32
  %586 = vmatprep.subr.mxu0 0.0
  %587 = vmatpush1.msra.mxu0 %v31
  %588 = vmatprep.subr.mxu0 0.0
  %589 = vmatpush1.msra.mxu0 %v30
  %590 = vmatprep.subr.mxu0 0.0
  %591 = vmatpush1.msra.mxu0 %v29
  %592 = vmatprep.subr.mxu0 0.0
  %593 = vmatpush1.msra.mxu0 %v28
  %594 = vmatprep.subr.mxu0 0.0
  %595 = vmatpush2.msra.mxu0 %v59
  %596 = vmatprep.subr.mxu0 0.0
  %597 = vmatpush2.msra.mxu0 %v58
  %598 = vmatprep.subr.mxu0 0.0
  %599 = vmatpush2.msra.mxu0 %v57
  %600 = vmatprep.subr.mxu0 0.0
  %601 = vmatpush2.msra.mxu0 %v56
  %602 = vmatprep.subr.mxu0 0.0
  %603 = vmatpush2.msra.mxu0 %v55
  %604 = vmatprep.subr.mxu0 0.0
  %605 = vmatpush2.msra.mxu0 %v54
  %606 = vmatprep.subr.mxu0 0.0
  %607 = vmatpush2.msra.mxu0 %v53
  %608 = vmatprep.subr.mxu0 0.0
  %609 = vmatpush2.msra.mxu0 %v52
  %610 = vmatprep.subr.mxu0 0.0
  %611 = vmatpush2.msra.mxu0 %v51
  %612 = vmatprep.subr.mxu0 0.0
  %613 = vmatpush2.msra.mxu0 %v50
  %614 = vmatprep.subr.mxu0 0.0
  %615 = vmatpush2.msra.mxu0 %v49
  %616 = vmatprep.subr.mxu0 0.0
  %617 = vmatpush2.msra.mxu0 %v48
  %618 = vmatprep.subr.mxu0 0.0
  %619 = vmatpush2.msra.mxu0 %v47
  %620 = vmatprep.subr.mxu0 0.0
  %621 = vmatpush2.msra.mxu0 %v46
  %622 = vmatprep.subr.mxu0 0.0
  %623 = vmatpush2.msra.mxu0 %v45
  %624 = vmatprep.subr.mxu0 0.0
  %625 = vmatpush2.msra.mxu0 %v44
  %626 = vmatprep.mubr.f32.mxu0 %v551
  %627 = vmatmul.mubr.f32.gmra.mxu0 %v550
  %v628 = vpop.f32.mrf.mxu0
  %v629 = vadd.f32 0.0, %v628
  %v630 = vpop.f32.mrf.mxu0
  %631 = vmatprep.mubr.f32.mxu0 %v557
  %632 = vmatmul.mubr.f32.gmra.mxu0 %v556
  %v633 = vpop.f32.mrf.mxu0
  %v634 = vadd.f32 0.0, %v633
  %v635 = vpop.f32.mrf.mxu0
  %636 = vdwg.mxu0
  %637 = vmatprep.subr.mxu0 0.0
  %638 = vmatpush1.msra.mxu0 %v75
  %639 = vmatprep.subr.mxu0 0.0
  %640 = vmatpush1.msra.mxu0 %v74
  %641 = vmatprep.subr.mxu0 0.0
  %642 = vmatpush1.msra.mxu0 %v73
  %643 = vmatprep.subr.mxu0 0.0
  %644 = vmatpush1.msra.mxu0 %v72
  %645 = vmatprep.subr.mxu0 0.0
  %646 = vmatpush1.msra.mxu0 %v71
  %647 = vmatprep.subr.mxu0 0.0
  %648 = vmatpush1.msra.mxu0 %v70
  %649 = vmatprep.subr.mxu0 0.0
  %650 = vmatpush1.msra.mxu0 %v69
  %651 = vmatprep.subr.mxu0 0.0
  %652 = vmatpush1.msra.mxu0 %v68
  %653 = vmatprep.subr.mxu0 0.0
  %654 = vmatpush1.msra.mxu0 %v67
  %655 = vmatprep.subr.mxu0 0.0
  %656 = vmatpush1.msra.mxu0 %v66
  %657 = vmatprep.subr.mxu0 0.0
  %658 = vmatpush1.msra.mxu0 %v65
  %659 = vmatprep.subr.mxu0 0.0
  %660 = vmatpush1.msra.mxu0 %v64
  %661 = vmatprep.subr.mxu0 0.0
  %662 = vmatpush1.msra.mxu0 %v63
  %663 = vmatprep.subr.mxu0 0.0
  %664 = vmatpush1.msra.mxu0 %v62
  %665 = vmatprep.subr.mxu0 0.0
  %666 = vmatpush1.msra.mxu0 %v61
  %667 = vmatprep.subr.mxu0 0.0
  %668 = vmatpush1.msra.mxu0 %v60
  %669 = vmatprep.subr.mxu0 0.0
  %670 = vmatpush2.msra.mxu0 %v91
  %671 = vmatprep.subr.mxu0 0.0
  %672 = vmatpush2.msra.mxu0 %v90
  %673 = vmatprep.subr.mxu0 0.0
  %674 = vmatpush2.msra.mxu0 %v89
  %675 = vmatprep.subr.mxu0 0.0
  %676 = vmatpush2.msra.mxu0 %v88
  %677 = vmatprep.subr.mxu0 0.0
  %678 = vmatpush2.msra.mxu0 %v87
  %679 = vmatprep.subr.mxu0 0.0
  %680 = vmatpush2.msra.mxu0 %v86
  %681 = vmatprep.subr.mxu0 0.0
  %682 = vmatpush2.msra.mxu0 %v85
  %683 = vmatprep.subr.mxu0 0.0
  %684 = vmatpush2.msra.mxu0 %v84
  %685 = vmatprep.subr.mxu0 0.0
  %686 = vmatpush2.msra.mxu0 %v83
  %687 = vmatprep.subr.mxu0 0.0
  %688 = vmatpush2.msra.mxu0 %v82
  %689 = vmatprep.subr.mxu0 0.0
  %690 = vmatpush2.msra.mxu0 %v81
  %691 = vmatprep.subr.mxu0 0.0
  %692 = vmatpush2.msra.mxu0 %v80
  %693 = vmatprep.subr.mxu0 0.0
  %694 = vmatpush2.msra.mxu0 %v79
  %695 = vmatprep.subr.mxu0 0.0
  %696 = vmatpush2.msra.mxu0 %v78
  %697 = vmatprep.subr.mxu0 0.0
  %698 = vmatpush2.msra.mxu0 %v77
  %699 = vmatprep.subr.mxu0 0.0
  %700 = vmatpush2.msra.mxu0 %v76
  %701 = vmatprep.mubr.f32.mxu0 %v553
  %702 = vmatmul.mubr.f32.gmra.mxu0 %v552
  %v703 = vpop.f32.mrf.mxu0
  %v704 = vadd.f32 %v629, %v703
  %v705 = vpop.f32.mrf.mxu0
  %706 = vmatprep.mubr.f32.mxu0 %v559
  %707 = vmatmul.mubr.f32.gmra.mxu0 %v558
  %v708 = vpop.f32.mrf.mxu0
  %v709 = vadd.f32 %v634, %v708
  %v710 = vpop.f32.mrf.mxu0
  %711 = vdwg.mxu0
  %712 = vmatprep.subr.mxu0 0.0
  %713 = vmatpush1.msra.mxu0 %v107
  %714 = vmatprep.subr.mxu0 0.0
  %715 = vmatpush1.msra.mxu0 %v106
  %716 = vmatprep.subr.mxu0 0.0
  %717 = vmatpush1.msra.mxu0 %v105
  %718 = vmatprep.subr.mxu0 0.0
  %719 = vmatpush1.msra.mxu0 %v104
  %720 = vmatprep.subr.mxu0 0.0
  %721 = vmatpush1.msra.mxu0 %v103
  %722 = vmatprep.subr.mxu0 0.0
  %723 = vmatpush1.msra.mxu0 %v102
  %724 = vmatprep.subr.mxu0 0.0
  %725 = vmatpush1.msra.mxu0 %v101
  %726 = vmatprep.subr.mxu0 0.0
  %727 = vmatpush1.msra.mxu0 %v100
  %728 = vmatprep.subr.mxu0 0.0
  %729 = vmatpush1.msra.mxu0 %v99
  %730 = vmatprep.subr.mxu0 0.0
  %731 = vmatpush1.msra.mxu0 %v98
  %732 = vmatprep.subr.mxu0 0.0
  %733 = vmatpush1.msra.mxu0 %v97
  %734 = vmatprep.subr.mxu0 0.0
  %735 = vmatpush1.msra.mxu0 %v96
  %736 = vmatprep.subr.mxu0 0.0
  %737 = vmatpush1.msra.mxu0 %v95
  %738 = vmatprep.subr.mxu0 0.0
  %739 = vmatpush1.msra.mxu0 %v94
  %740 = vmatprep.subr.mxu0 0.0
  %741 = vmatpush1.msra.mxu0 %v93
  %742 = vmatprep.subr.mxu0 0.0
  %743 = vmatpush1.msra.mxu0 %v92
  %744 = vmatprep.subr.mxu0 0.0
  %745 = vmatpush2.msra.mxu0 %v123
  %746 = vmatprep.subr.mxu0 0.0
  %747 = vmatpush2.msra.mxu0 %v122
  %748 = vmatprep.subr.mxu0 0.0
  %749 = vmatpush2.msra.mxu0 %v121
  %750 = vmatprep.subr.mxu0 0.0
  %751 = vmatpush2.msra.mxu0 %v120
  %752 = vmatprep.subr.mxu0 0.0
  %753 = vmatpush2.msra.mxu0 %v119
  %754 = vmatprep.subr.mxu0 0.0
  %755 = vmatpush2.msra.mxu0 %v118
  %756 = vmatprep.subr.mxu0 0.0
  %757 = vmatpush2.msra.mxu0 %v117
  %758 = vmatprep.subr.mxu0 0.0
  %759 = vmatpush2.msra.mxu0 %v116
  %760 = vmatprep.subr.mxu0 0.0
  %761 = vmatpush2.msra.mxu0 %v115
  %762 = vmatprep.subr.mxu0 0.0
  %763 = vmatpush2.msra.mxu0 %v114
  %764 = vmatprep.subr.mxu0 0.0
  %765 = vmatpush2.msra.mxu0 %v113
  %766 = vmatprep.subr.mxu0 0.0
  %767 = vmatpush2.msra.mxu0 %v112
  %768 = vmatprep.subr.mxu0 0.0
  %769 = vmatpush2.msra.mxu0 %v111
  %770 = vmatprep.subr.mxu0 0.0
  %771 = vmatpush2.msra.mxu0 %v110
  %772 = vmatprep.subr.mxu0 0.0
  %773 = vmatpush2.msra.mxu0 %v109
  %774 = vmatprep.subr.mxu0 0.0
  %775 = vmatpush2.msra.mxu0 %v108
  %776 = vmatprep.mubr.f32.mxu0 %v555
  %777 = vmatmul.mubr.f32.gmra.mxu0 %v554
  %v778 = vpop.f32.mrf.mxu0
  %v779 = vadd.f32 %v704, %v778
  %v780 = vpop.f32.mrf.mxu0
  %781 = vmatprep.mubr.f32.mxu0 %v561
  %782 = vmatmul.mubr.f32.gmra.mxu0 %v560
  %v783 = vpop.f32.mrf.mxu0
  %v784 = vadd.f32 %v709, %v783
  %v785 = vpop.f32.mrf.mxu0
  %786 = vdwg.mxu0
  %v788 = vrot.slane %v779, 6
  %v790 = vsel %vm365, 0.0, %v788
  %v793 = vrot.slane %v790, 1
  %v794 = vrot.slane 0.0, 1
  %v795 = vsel %vm370, %v793, %v794
  %796 = vrot.lane.b32.xlu0 %v795, 118
  %v797 = vpop.permute.xlu0 %796
  %v799 = vadd.f32 %v790, %v797
  %v800 = vrot.slane %v790, 2
  %v801 = vrot.slane 0.0, 2
  %v802 = vsel %vm382, %v800, %v801
  %803 = vrot.lane.b32.xlu0 %v802, 108
  %v804 = vpop.permute.xlu0 %803
  %v806 = vadd.f32 %v799, %v804
  %v807 = vsel %vm394, %v806, -inf
  %v808 = vrot.slane %v807, 4
  %v809 = vmax.f32 %v807, %v808
  %v810 = vrot.slane %v809, 2
  %v811 = vmax.f32 %v809, %v810
  %v812 = vrot.slane %v811, 1
  %v813 = vmax.f32 %v811, %v812
  %814 = vrot.lane.b32.xlu0 %v793, 118
  %v815 = vpop.permute.xlu0 %814
  %v817 = vadd.f32 %v790, %v815
  %v818 = vadd.f32 %v817, %v804
  %v819 = vrot.slane %v790, 3
  %v820 = vrot.slane 0.0, 3
  %v821 = vsel %vm405, %v819, %v820
  %822 = vrot.lane.b32.xlu0 %v821, 98
  %v823 = vpop.permute.xlu0 %822
  %v825 = vadd.f32 %v818, %v823
  %vm826 = vcmask 325872
  %v827 = vsel %vm826, %v825, -inf
  %v828 = vrot.slane %v827, 4
  %v829 = vmax.f32 %v827, %v828
  %v830 = vrot.slane %v829, 2
  %v831 = vmax.f32 %v829, %v830
  %v832 = vrot.slane %v831, 1
  %v833 = vmax.f32 %v831, %v832
  %834 = vrot.lane.b32.xlu0 %v800, 108
  %v835 = vpop.permute.xlu0 %834
  %v837 = vadd.f32 %v817, %v835
  %v838 = vadd.f32 %v837, %v823
  %v839 = vrot.slane %v790, 4
  %v840 = vrot.slane 0.0, 4
  %v841 = vsel %vm428, %v839, %v840
  %842 = vrot.lane.b32.xlu0 %v841, 88
  %v843 = vpop.permute.xlu0 %842
  %v845 = vadd.f32 %v838, %v843
  %vm846 = vcmask 652848
  %v847 = vsel %vm846, %v845, -inf
  %v848 = vrot.slane %v847, 4
  %v849 = vmax.f32 %v847, %v848
  %v850 = vrot.slane %v849, 2
  %v851 = vmax.f32 %v849, %v850
  %v852 = vrot.slane %v851, 1
  %v853 = vmax.f32 %v851, %v852
  %855 = vrot.lane.b32.xlu0 %v833, 108
  %v856 = vpop.permute.xlu0 %855
  %859 = vrot.lane.b32.xlu0 %v853, 78
  %v860 = vpop.permute.xlu0 %859
  %v862 = vsel %vm394, %v813, %v856
  %v863 = vsel %vm453, %v862, %v860
  %v865 = vrot.slane %v779, 4
  %v866 = vrot.slane %v784, 4
  %v867 = vsel %vm428, %v865, %v866
  %v869 = vsel %vm365, 0.0, %v867
  %v871 = vrot.slane %v869, 1
  %v872 = vsel %vm370, %v871, %v794
  %873 = vrot.lane.b32.xlu0 %v872, 118
  %v874 = vpop.permute.xlu0 %873
  %v876 = vadd.f32 %v869, %v874
  %v877 = vrot.slane %v869, 2
  %v878 = vsel %vm382, %v877, %v801
  %879 = vrot.lane.b32.xlu0 %v878, 108
  %v880 = vpop.permute.xlu0 %879
  %v882 = vadd.f32 %v876, %v880
  %v883 = vsel %vm394, %v882, -inf
  %v884 = vrot.slane %v883, 4
  %v885 = vmax.f32 %v883, %v884
  %v886 = vrot.slane %v885, 2
  %v887 = vmax.f32 %v885, %v886
  %v888 = vrot.slane %v887, 1
  %v889 = vmax.f32 %v887, %v888
  %890 = vrot.lane.b32.xlu0 %v871, 118
  %v891 = vpop.permute.xlu0 %890
  %v893 = vadd.f32 %v869, %v891
  %v894 = vadd.f32 %v893, %v880
  %v895 = vrot.slane %v869, 3
  %v896 = vsel %vm405, %v895, %v820
  %897 = vrot.lane.b32.xlu0 %v896, 98
  %v898 = vpop.permute.xlu0 %897
  %v900 = vadd.f32 %v894, %v898
  %v901 = vsel %vm826, %v900, -inf
  %v902 = vrot.slane %v901, 4
  %v903 = vmax.f32 %v901, %v902
  %v904 = vrot.slane %v903, 2
  %v905 = vmax.f32 %v903, %v904
  %v906 = vrot.slane %v905, 1
  %v907 = vmax.f32 %v905, %v906
  %908 = vrot.lane.b32.xlu0 %v877, 108
  %v909 = vpop.permute.xlu0 %908
  %v911 = vadd.f32 %v893, %v909
  %v912 = vadd.f32 %v911, %v898
  %v913 = vrot.slane %v869, 4
  %v914 = vsel %vm428, %v913, %v840
  %915 = vrot.lane.b32.xlu0 %v914, 88
  %v916 = vpop.permute.xlu0 %915
  %v918 = vadd.f32 %v912, %v916
  %v919 = vsel %vm846, %v918, -inf
  %v920 = vrot.slane %v919, 4
  %v921 = vmax.f32 %v919, %v920
  %v922 = vrot.slane %v921, 2
  %v923 = vmax.f32 %v921, %v922
  %v924 = vrot.slane %v923, 1
  %v925 = vmax.f32 %v923, %v924
  %927 = vrot.lane.b32.xlu0 %v907, 108
  %v928 = vpop.permute.xlu0 %927
  %931 = vrot.lane.b32.xlu0 %v925, 78
  %v932 = vpop.permute.xlu0 %931
  %v934 = vsel %vm394, %v889, %v928
  %v935 = vsel %vm453, %v934, %v932
  %v937 = vrot.slane %v935, 7
  %v939 = vsel %vm540, %v863, %v937
  %v940 = vadd.f32 %v939, %v546
  %v941 = vmax.f32 %v940, 0.0
  %v942 = vmul.f32 %v549, %v941
  %v943 = vld [vmem:[%s4] sm:$0xff]
  %v944 = vld [vmem:[%s4 + $0x8] sm:$0xff]
  %v945 = vld [vmem:[%s4 + $0x10] sm:$0xff]
  %v946 = vld [vmem:[%s4 + $0x18] sm:$0x3f]
  %v947 = vld [vmem:[#allocation2] sm:$0x1]
  %v949 = vlaneseq
  %v950 = vshrl.u32 %v949, 7
  %v951 = vsub.s32 0, %v950
  %v952 = vrot.slane %v947, %v951
  %vm954 = vcmask 244736
  %v956 = vsel %vm954, %v942, 0
  %v959 = vsel %vm382, %v946, 0
  %961 = vmatprep.subr.mxu0 0.0
  %962 = vmatpush1.msra.mxu0 0.0
  %963 = vmatprep.subr.mxu0 0.0
  %964 = vmatpush1.msra.mxu0 0.0
  %965 = vmatprep.subr.mxu0 0.0
  %966 = vmatpush1.msra.mxu0 0.0
  %967 = vmatprep.subr.mxu0 0.0
  %968 = vmatpush1.msra.mxu0 0.0
  %969 = vmatprep.subr.mxu0 0.0
  %970 = vmatpush1.msra.mxu0 0.0
  %971 = vmatprep.subr.mxu0 0.0
  %972 = vmatpush1.msra.mxu0 0.0
  %973 = vmatprep.subr.mxu0 0.0
  %974 = vmatpush1.msra.mxu0 0.0
  %975 = vmatprep.subr.mxu0 0.0
  %976 = vmatpush1.msra.mxu0 0.0
  %977 = vmatprep.subr.mxu0 0.0
  %978 = vmatpush1.msra.mxu0 0.0
  %979 = vmatprep.subr.mxu0 0.0
  %980 = vmatpush1.msra.mxu0 0.0
  %981 = vmatprep.subr.mxu0 0.0
  %982 = vmatpush1.msra.mxu0 0.0
  %983 = vmatprep.subr.mxu0 0.0
  %984 = vmatpush1.msra.mxu0 0.0
  %985 = vmatprep.subr.mxu0 0.0
  %986 = vmatpush1.msra.mxu0 %v959
  %987 = vmatprep.subr.mxu0 0.0
  %988 = vmatpush1.msra.mxu0 %v945
  %989 = vmatprep.subr.mxu0 0.0
  %990 = vmatpush1.msra.mxu0 %v944
  %991 = vmatprep.subr.mxu0 0.0
  %992 = vmatpush1.msra.mxu0 %v943
  %993 = vmatprep.subr.mxu0 0.0
  %994 = vmatpush2.msra.mxu0 0.0
  %995 = vmatprep.subr.mxu0 0.0
  %996 = vmatpush2.msra.mxu0 0.0
  %997 = vmatprep.subr.mxu0 0.0
  %998 = vmatpush2.msra.mxu0 0.0
  %999 = vmatprep.subr.mxu0 0.0
  %1000 = vmatpush2.msra.mxu0 0.0
  %1001 = vmatprep.subr.mxu0 0.0
  %1002 = vmatpush2.msra.mxu0 0.0
  %1003 = vmatprep.subr.mxu0 0.0
  %1004 = vmatpush2.msra.mxu0 0.0
  %1005 = vmatprep.subr.mxu0 0.0
  %1006 = vmatpush2.msra.mxu0 0.0
  %1007 = vmatprep.subr.mxu0 0.0
  %1008 = vmatpush2.msra.mxu0 0.0
  %1009 = vmatprep.subr.mxu0 0.0
  %1010 = vmatpush2.msra.mxu0 0.0
  %1011 = vmatprep.subr.mxu0 0.0
  %1012 = vmatpush2.msra.mxu0 0.0
  %1013 = vmatprep.subr.mxu0 0.0
  %1014 = vmatpush2.msra.mxu0 0.0
  %1015 = vmatprep.subr.mxu0 0.0
  %1016 = vmatpush2.msra.mxu0 0.0
  %1017 = vmatprep.subr.mxu0 0.0
  %1018 = vmatpush2.msra.mxu0 0.0
  %1019 = vmatprep.subr.mxu0 0.0
  %1020 = vmatpush2.msra.mxu0 0.0
  %1021 = vmatprep.subr.mxu0 0.0
  %1022 = vmatpush2.msra.mxu0 0.0
  %1023 = vmatprep.subr.mxu0 0.0
  %1024 = vmatpush2.msra.mxu0 0.0
  %1025 = vmatprep.mubr.f32.mxu0 0.0
  %1026 = vmatmul.mubr.f32.gmra.mxu0 %v956
  %v1027 = vpop.f32.mrf.mxu0
  %v1028 = vadd.f32 %v952, %v1027
  %v1029 = vpop.f32.mrf.mxu0
  %1030 = vdwg.mxu0
  %v1031 = vxor.u32 %v1028, 2147483648
  %v1032 = vmul.f32 %v1031, 1.442695
  %v1033 = vpow.pop %v1032
  %v1034 = vadd.f32 %v1033, 1.0
  %v1035 = vrcp.pop %v1034
  %v1036 = vmul.f32 1.0, %v1035
  %v1037 = vld [vmem:[%s6] sm:$0x3]
  %v1038 = vlog2.pop %v1036
  %v1039 = vmul.f32 %v1038, 0.6931472
  %v1040 = vmax.f32 %v1039, -100.0
  %v1041 = vsub.f32 1.0, %v1036
  %v1042 = vlog2.pop %v1041
  %v1043 = vmul.f32 %v1042, 0.6931472
  %v1044 = vmax.f32 %v1043, -100.0
  %v1045 = vmul.f32 %v1037, %v1040
  %v1046 = vsub.f32 1.0, %v1037
  %v1047 = vmul.f32 %v1046, %v1044
  %v1048 = vadd.f32 %v1045, %v1047
  %v1049 = vsub.f32 0.0, %v1048
  %vm1050 = vcmask 1024
  %1051 = vst.msk [vmem:[%s7] sm:$0x3] %vm1050, %v1049
  // Predicated region
  $region30: #{tpu_custom_call.1} parent=0 // pred_check
    _
  $region31: #{tpu_custom_call.1} parent=0 // pred_check_branch
    %1053 = sbr.rel (0) target = $region33
  $region32: #{tpu_custom_call.1} parent=0 // pred_region
    _
  $region33: #{tpu_custom_call.1} parent=0 // pred_fallthru
    _
  // Predicated region
  $region34: #{tpu_custom_call.1} parent=0 // pred_check
    _
  $region35: #{tpu_custom_call.1} parent=0 // pred_check_branch
    %1055 = sbr.rel (0) target = $region37
  $region36: #{tpu_custom_call.1} parent=0 // pred_region
    _
  $region37: #{tpu_custom_call.1} parent=0 // pred_fallthru
    _

</llo_original>
